<compile_context>
chip_gen: v5e
topology: v5e:2x2
jax: 0.10.0
libtpu: 0.0.40
codegen_flags: <defaults>
</compile_context>

<pallas_src>
import functools

import jax
import jax.numpy as jnp
from jax import lax
from jax.experimental import pallas as pl
from jax.experimental.pallas import tpu as pltpu


def _vae2d_kernel(x_ref, w_ref, b_ref, mu_ref, sd_ref):
    """x: [K, tm], w: [2C, K], b: [2C, 1] -> mu, sd: [C, tm]."""
    c_out = mu_ref.shape[0]
    # One fused MXU matmul for both heads (mu = rows 0:C, sigma = rows C:2C).
    z = jnp.dot(w_ref[...], x_ref[...], preferred_element_type=jnp.float32)
    z = z + b_ref[...]                       # lane-broadcast of the bias column
    mu = z[:c_out, :]                        # row split at a sublane boundary
    s = z[c_out:, :]
    # Numerically stable softplus: max(s, 0) + log1p(exp(-|s|)).
    sd = jnp.maximum(s, 0.0) + jnp.log1p(jnp.exp(-jnp.abs(s)))
    mu_ref[...] = mu.astype(mu_ref.dtype)
    sd_ref[...] = sd.astype(sd_ref.dtype)


def _im2col_km(x, kernel_size, stride, padding):
    """x: NCHW -> patches [K, M]; K ordered (c, kh, kw), M ordered (n, ho, wo)."""
    N, C, H, W = x.shape
    KH = KW = kernel_size
    Ho = (H + 2 * padding - KH) // stride + 1
    Wo = (W + 2 * padding - KW) // stride + 1
    xp = jnp.pad(x, ((0, 0), (0, 0), (padding, padding), (padding, padding)))
    cols = []
    for kh in range(KH):
        for kw in range(KW):
            cols.append(
                xp[:, :, kh:kh + Ho * stride:stride, kw:kw + Wo * stride:stride]
            )  # (N, C, Ho, Wo)
    patches = jnp.stack(cols, axis=2)             # (N, C, KH*KW, Ho, Wo)
    patches = patches.transpose(1, 2, 0, 3, 4)    # (C, KH*KW, N, Ho, Wo)
    return patches.reshape(C * KH * KW, N * Ho * Wo), (N, Ho, Wo)


def _round_up(a, b):
    return ((a + b - 1) // b) * b


@functools.partial(jax.jit,
                   static_argnames=("kernel_size", "stride", "padding", "tm"))
def gaussian_vae2d_forward(x, w_mu, b_mu, w_sg, b_sg, *, kernel_size, stride,
                           padding, tm=256):
    """x: NCHW float32.  w_*: (C_out, C_in, KH, KW).  b_*: (C_out,).

    tm must be a multiple of 128 (lane tile of the output).
    """
    c_out = w_mu.shape[0]
    K = w_mu.shape[1] * w_mu.shape[2] * w_mu.shape[3]

    x_cols, (N, Ho, Wo) = _im2col_km(x, kernel_size, stride, padding)  # (K, M)
    M = x_cols.shape[1]

    # Pick the lane tile: multiple of 128, no larger than needed, and keep
    # >= 2 grid steps when possible so both v7x TensorCores get work.
    tm = min(tm, _round_up(M, 128))
    if _round_up(M, tm) // tm == 1 and tm >= 256 and (tm // 2) % 128 == 0:
        tm //= 2
    M_pad = _round_up(M, tm)
    n_tiles = M_pad // tm

    if M_pad != M:
        x_cols = jnp.pad(x_cols, ((0, 0), (0, M_pad - M)))

    # Fuse the two heads: [2*C_out, K] weights and [2*C_out, 1] bias.
    w_fused = jnp.concatenate(
        [w_mu.reshape(c_out, K), w_sg.reshape(c_out, K)], axis=0)
    b_fused = jnp.concatenate([b_mu, b_sg], axis=0).reshape(2 * c_out, 1)

    mu_flat, sd_flat = pl.pallas_call(
        _vae2d_kernel,
        out_shape=(
            jax.ShapeDtypeStruct((c_out, M_pad), x.dtype),
            jax.ShapeDtypeStruct((c_out, M_pad), x.dtype),
        ),
        grid_spec=pltpu.PrefetchScalarGridSpec(
            num_scalar_prefetch=0,
            grid=(n_tiles,),
            in_specs=[
                pl.BlockSpec((K, tm), lambda i: (0, i)),          # patch cols
                pl.BlockSpec((2 * c_out, K), lambda i: (0, 0)),   # fused W
                pl.BlockSpec((2 * c_out, 1), lambda i: (0, 0)),   # fused bias
            ],
            out_specs=[
                pl.BlockSpec((c_out, tm), lambda i: (0, i)),
                pl.BlockSpec((c_out, tm), lambda i: (0, i)),
            ],
        ),
        compiler_params=pltpu.CompilerParams(
            dimension_semantics=("parallel",)),
    )(x_cols, w_fused, b_fused)

    mu = mu_flat[:, :M].reshape(c_out, N, Ho, Wo).transpose(1, 0, 2, 3)  # NCHW
    sd = sd_flat[:, :M].reshape(c_out, N, Ho, Wo).transpose(1, 0, 2, 3)  # NCHW
    return mu, sd


def _reference_forward(x, w_mu, b_mu, w_sg, b_sg, stride, padding):
    dn = ("NCHW", "OIHW", "NCHW")
    conv = lambda w: lax.conv_general_dilated(
        x, w, window_strides=(stride, stride),
        padding=((padding, padding), (padding, padding)),
        dimension_numbers=dn)
    mu = conv(w_mu) + b_mu[None, :, None, None]
    z = conv(w_sg) + b_sg[None, :, None, None]
    sd = jax.nn.softplus(z)
    return mu, sd


if __name__ == "__main__":
    # Module config (matches GaussianVAE2D(n_in=4, n_out=8, kernel_size=3,
    # stride=1, padding=1)); input: NCHW (2, 4, 16, 16).
    n_in, n_out, ksize, stride, padding = 4, 8, 3, 1, 1
    N, H, W = 2, 16, 16

    key = jax.random.PRNGKey(0)
    kx, k1, k2, k3, k4 = jax.random.split(key, 5)
    x = jax.random.normal(kx, (N, n_in, H, W), dtype=jnp.float32)
    # reset_parameters(): all weights/biases ~ N(0, 0.002)
    w_mu = 0.002 * jax.random.normal(k1, (n_out, n_in, ksize, ksize), jnp.float32)
    b_mu = 0.002 * jax.random.normal(k2, (n_out,), jnp.float32)
    w_sg = 0.002 * jax.random.normal(k3, (n_out, n_in, ksize, ksize), jnp.float32)
    b_sg = 0.002 * jax.random.normal(k4, (n_out,), jnp.float32)

    mu, sd = gaussian_vae2d_forward(
        x, w_mu, b_mu, w_sg, b_sg,
        kernel_size=ksize, stride=stride, padding=padding)
    jax.block_until_ready((mu, sd))

    mu_ref, sd_ref = _reference_forward(x, w_mu, b_mu, w_sg, b_sg, stride, padding)
    assert mu.shape == (N, n_out, H, W) and sd.shape == (N, n_out, H, W)
    assert jnp.allclose(mu, mu_ref, atol=1e-5, rtol=1e-5), "mu mismatch"
    assert jnp.allclose(sd, sd_ref, atol=1e-5, rtol=1e-5), "sd mismatch"

    print("KERNEL_OK")
</pallas_src>

<mosaic_0001>
module attributes {stable_mosaic.version = 11 : i64} {
  func.func @_vae2d_kernel(%arg0: i32, %arg1: memref<36x256xf32, #tpu.memory_space<vmem>>, %arg2: memref<16x36xf32, #tpu.memory_space<vmem>>, %arg3: memref<16x1xf32, #tpu.memory_space<vmem>>, %arg4: memref<8x256xf32, #tpu.memory_space<vmem>>, %arg5: memref<8x256xf32, #tpu.memory_space<vmem>>) attributes {dimension_semantics = [#tpu.dimension_semantics<parallel>], iteration_bounds = array<i64: 2>, scalar_prefetch = 0 : i64, scratch_operands = 0 : i64, tpu.core_type = #tpu.core_type<tc>, window_params = [{transform_indices = @transform_0, window_bounds = array<i64: 36, 256>}, {pipeline_mode = #tpu.pipeline_mode<synchronous>, transform_indices = @transform_1, window_bounds = array<i64: 16, 36>}, {pipeline_mode = #tpu.pipeline_mode<synchronous>, transform_indices = @transform_2, window_bounds = array<i64: 16, 1>}, {transform_indices = @transform_3, window_bounds = array<i64: 8, 256>}, {transform_indices = @transform_4, window_bounds = array<i64: 8, 256>}]} {
    %c0 = arith.constant 0 : index
    %c0_0 = arith.constant 0 : index
    %0 = vector.load %arg2[%c0, %c0_0] : memref<16x36xf32, #tpu.memory_space<vmem>>, vector<16x36xf32>
    %c0_1 = arith.constant 0 : index
    %c0_2 = arith.constant 0 : index
    %1 = vector.load %arg1[%c0_1, %c0_2] : memref<36x256xf32, #tpu.memory_space<vmem>>, vector<36x256xf32>
    %cst = arith.constant dense<0.000000e+00> : vector<16x256xf32>
    %2 = tpu.matmul %0, %1, %cst {dimension_numbers = #tpu.dot_dimension_numbers<[1], [0], [0], [1], [0, 0, 1, 1], [], []>} : vector<16x36xf32>, vector<36x256xf32>, vector<16x256xf32> -> vector<16x256xf32>
    %c0_3 = arith.constant 0 : index
    %c0_4 = arith.constant 0 : index
    %3 = vector.load %arg3[%c0_3, %c0_4] : memref<16x1xf32, #tpu.memory_space<vmem>>, vector<16x1xf32>
    %4 = vector.broadcast %3 : vector<16x1xf32> to vector<16x256xf32>
    %5 = arith.addf %2, %4 : vector<16x256xf32>
    %6 = vector.extract_strided_slice %5 {offsets = [0, 0], sizes = [8, 256], strides = [1, 1]} : vector<16x256xf32> to vector<8x256xf32>
    %7 = vector.extract_strided_slice %5 {offsets = [8, 0], sizes = [8, 256], strides = [1, 1]} : vector<16x256xf32> to vector<8x256xf32>
    %cst_5 = arith.constant 0.000000e+00 : f32
    %8 = vector.broadcast %cst_5 : f32 to vector<8x256xf32>
    %9 = arith.maximumf %7, %8 : vector<8x256xf32>
    %10 = math.absf %7 : vector<8x256xf32>
    %cst_6 = arith.constant 0.000000e+00 : f32
    %11 = vector.broadcast %cst_6 : f32 to vector<8x256xf32>
    %12 = arith.subf %11, %10 : vector<8x256xf32>
    %13 = math.exp %12 : vector<8x256xf32>
    %14 = math.log1p %13 : vector<8x256xf32>
    %15 = arith.addf %9, %14 : vector<8x256xf32>
    %c0_7 = arith.constant 0 : index
    %c0_8 = arith.constant 0 : index
    %16 = vector.load %arg4[%c0_7, %c0_8] : memref<8x256xf32, #tpu.memory_space<vmem>>, vector<8x256xf32>
    tpu.vector_store %arg4[%c0_7, %c0_8], %6 {strides = array<i32>} : memref<8x256xf32, #tpu.memory_space<vmem>>, vector<8x256xf32>,
    %c0_9 = arith.constant 0 : index
    %c0_10 = arith.constant 0 : index
    %17 = vector.load %arg5[%c0_9, %c0_10] : memref<8x256xf32, #tpu.memory_space<vmem>>, vector<8x256xf32>
    tpu.vector_store %arg5[%c0_9, %c0_10], %15 {strides = array<i32>} : memref<8x256xf32, #tpu.memory_space<vmem>>, vector<8x256xf32>,
    return
  }
  func.func @transform_0(%arg0: i32) -> (i32, i32) {
    %c0_i32 = arith.constant 0 : i32
    %c0_i32_0 = arith.constant 0 : i32
    return %c0_i32, %arg0 : i32, i32
  }
  func.func @transform_1(%arg0: i32) -> (i32, i32) {
    %c0_i32 = arith.constant 0 : i32
    %c0_i32_0 = arith.constant 0 : i32
    %c0_i32_1 = arith.constant 0 : i32
    return %c0_i32, %c0_i32_0 : i32, i32
  }
  func.func @transform_2(%arg0: i32) -> (i32, i32) {
    %c0_i32 = arith.constant 0 : i32
    %c0_i32_0 = arith.constant 0 : i32
    %c0_i32_1 = arith.constant 0 : i32
    return %c0_i32, %c0_i32_0 : i32, i32
  }
  func.func @transform_3(%arg0: i32) -> (i32, i32) {
    %c0_i32 = arith.constant 0 : i32
    %c0_i32_0 = arith.constant 0 : i32
    return %c0_i32, %arg0 : i32, i32
  }
  func.func @transform_4(%arg0: i32) -> (i32, i32) {
    %c0_i32 = arith.constant 0 : i32
    %c0_i32_0 = arith.constant 0 : i32
    return %c0_i32, %arg0 : i32, i32
  }
}

</mosaic_0001>

<llo_original>
// kernel: gaussian_vae2d_forward.1
$region0: #{gaussian_vae2d_forward.1}
  #allocation0 [shape = 'u32[]', space=smem, size = 0x4, offset = 0x4, fixed_abs, tag = 'smem constant byte address 0x4 - core index']
  #allocation1 [shape = 'u32[72,128]{1,0:T(1,128)}', space=vmem, size = 0x9000, scoped, tag = 'internal scratch']
  %s0 = inlined_call_operand.vmem [shape: f32[36,512], index: 0, kind: input, shape index: {}]
  %s1 = inlined_call_operand.vmem [shape: f32[16,36], index: 1, kind: input, shape index: {}]
  %s2 = inlined_call_operand.vmem [shape: f32[16,1], index: 2, kind: input, shape index: {}]
  %s3 = inlined_call_operand.vmem [shape: f32[8,512], index: 3, kind: output, shape index: {0}]
  %s4 = inlined_call_operand.vmem [shape: f32[8,512], index: 4, kind: output, shape index: {1}]
  %5 = xla_tuple %s3, %s4
  %s6 = sld [smem:[#allocation0]]
  $region76: #{gaussian_vae2d_forward.1} parent=0
    _
  %s8 = ssub.s32 1, %s6
  %s9 = scalar_select 0, %s8, %s6
  $region1: #{gaussian_vae2d_forward.1} parent=0
    #allocation2 [shape = 'u8[81920]{0}', space=vmem, size = 0x14000, scoped, tag = 'input window, operand 0']
    loop: start=0, step=1, limit=4
    $region2: #{gaussian_vae2d_forward.1} parent=1 // loop_pre_header
      _
    $region3: #{gaussian_vae2d_forward.1} parent=1 // loop_header
      %s11 = sphi 0, %s15
      %p12 = scmp.ge.s32.totalorder %s11, 4
      %s21 = sphi 0, %s23
      %s24 = sphi 0, %s21
      %s25 = sphi 0, %s24
      %s41 = sphi 0, %s25
      %s45 = sphi 0, %s45
      %s47 = sphi 0, %s45
      %s48 = sphi 0, %s47
      %s62 = sphi 0, %s48
      %s66 = sphi 0, %s66
      %s68 = sphi 0, %s66
      %s69 = sphi 0, %s68
      %s83 = sphi 0, %s69
      %s89 = sphi 0, %s91
      %s92 = sphi 0, %s89
      %s93 = sphi 0, %s92
      %s109 = sphi 0, %s93
      %s115 = sphi 0, %s117
      %s118 = sphi 0, %s115
      %s119 = sphi 0, %s118
      %s135 = sphi 0, %s119
    $region4: #{gaussian_vae2d_forward.1} parent=1 // loop_header_branch
      %14 = sbr.rel (%p12) target = $region8
    $region5: #{gaussian_vae2d_forward.1} parent=1 // loop_body
      %s16 = ssub.s32 %s11, 1
      %s17 = ssub.s32 %s11, 2
      %s18 = sadd.s32 %s11, 1
      %s19 = ssub.s32 %s11, %s18
      %p20 = scmp.eq.s32.totalorder %s19, 0
      %s22 = sadd.s32 %s21, 1
      %s23 = scalar_select %p20, %s21, %s22
      %p26 = pneg %p20
      %p27 = scmp.eq.s32.totalorder %s11, 1
      %p28 = por %p26, %p27
      %p29 = scmp.ne.s32.totalorder %s21, %s24
      %p30 = scmp.eq.s32.totalorder %s11, 0
      %p31 = por %p29, %p30
      %p32 = scmp.ne.s32.totalorder %s21, %s24
      %p33 = scmp.eq.s32.totalorder %s16, 1
      %p34 = por %p32, %p33
      %p35 = scmp.ne.s32.totalorder %s24, %s25
      %p36 = scmp.eq.s32.totalorder %s16, 0
      %p37 = por %p35, %p36
      %p38 = scmp.ne.s32.totalorder %s24, %s25
      %p39 = scmp.eq.s32.totalorder %s17, 1
      %p40 = por %p38, %p39
      %p42 = scmp.ne.s32.totalorder %s25, %s41
      %p43 = scmp.eq.s32.totalorder %s17, 0
      %p44 = por %p42, %p43
      %s46 = sadd.s32 %s45, 1
      %p49 = scmp.eq.s32.totalorder %s11, 1
      %p50 = scmp.ne.s32.totalorder %s45, %s47
      %p51 = scmp.eq.s32.totalorder %s11, 0
      %p52 = por %p50, %p51
      %p53 = scmp.ne.s32.totalorder %s45, %s47
      %p54 = scmp.eq.s32.totalorder %s16, 1
      %p55 = por %p53, %p54
      %p56 = scmp.ne.s32.totalorder %s47, %s48
      %p57 = scmp.eq.s32.totalorder %s16, 0
      %p58 = por %p56, %p57
      %p59 = scmp.ne.s32.totalorder %s47, %s48
      %p60 = scmp.eq.s32.totalorder %s17, 1
      %p61 = por %p59, %p60
      %p63 = scmp.ne.s32.totalorder %s48, %s62
      %p64 = scmp.eq.s32.totalorder %s17, 0
      %p65 = por %p63, %p64
      %s67 = sadd.s32 %s66, 1
      %p70 = scmp.eq.s32.totalorder %s11, 1
      %p71 = scmp.ne.s32.totalorder %s66, %s68
      %p72 = scmp.eq.s32.totalorder %s11, 0
      %p73 = por %p71, %p72
      %p74 = scmp.ne.s32.totalorder %s66, %s68
      %p75 = scmp.eq.s32.totalorder %s16, 1
      %p76 = por %p74, %p75
      %p77 = scmp.ne.s32.totalorder %s68, %s69
      %p78 = scmp.eq.s32.totalorder %s16, 0
      %p79 = por %p77, %p78
      %p80 = scmp.ne.s32.totalorder %s68, %s69
      %p81 = scmp.eq.s32.totalorder %s17, 1
      %p82 = por %p80, %p81
      %p84 = scmp.ne.s32.totalorder %s69, %s83
      %p85 = scmp.eq.s32.totalorder %s17, 0
      %p86 = por %p84, %p85
      %s87 = ssub.s32 %s11, %s18
      %p88 = scmp.eq.s32.totalorder %s87, 0
      %s90 = sadd.s32 %s89, 1
      %s91 = scalar_select %p88, %s89, %s90
      %p94 = pneg %p88
      %p95 = scmp.eq.s32.totalorder %s11, 1
      %p96 = por %p94, %p95
      %p97 = scmp.ne.s32.totalorder %s89, %s92
      %p98 = scmp.eq.s32.totalorder %s11, 0
      %p99 = por %p97, %p98
      %p100 = scmp.ne.s32.totalorder %s89, %s92
      %p101 = scmp.eq.s32.totalorder %s16, 1
      %p102 = por %p100, %p101
      %p103 = scmp.ne.s32.totalorder %s92, %s93
      %p104 = scmp.eq.s32.totalorder %s16, 0
      %p105 = por %p103, %p104
      %p106 = scmp.ne.s32.totalorder %s92, %s93
      %p107 = scmp.eq.s32.totalorder %s17, 1
      %p108 = por %p106, %p107
      %p110 = scmp.ne.s32.totalorder %s93, %s109
      %p111 = scmp.eq.s32.totalorder %s17, 0
      %p112 = por %p110, %p111
      %s113 = ssub.s32 %s11, %s18
      %p114 = scmp.eq.s32.totalorder %s113, 0
      %s116 = sadd.s32 %s115, 1
      %s117 = scalar_select %p114, %s115, %s116
      %p120 = pneg %p114
      %p121 = scmp.eq.s32.totalorder %s11, 1
      %p122 = por %p120, %p121
      %p123 = scmp.ne.s32.totalorder %s115, %s118
      %p124 = scmp.eq.s32.totalorder %s11, 0
      %p125 = por %p123, %p124
      %p126 = scmp.ne.s32.totalorder %s115, %s118
      %p127 = scmp.eq.s32.totalorder %s16, 1
      %p128 = por %p126, %p127
      %p129 = scmp.ne.s32.totalorder %s118, %s119
      %p130 = scmp.eq.s32.totalorder %s16, 0
      %p131 = por %p129, %p130
      %p132 = scmp.ne.s32.totalorder %s118, %s119
      %p133 = scmp.eq.s32.totalorder %s17, 1
      %p134 = por %p132, %p133
      %p136 = scmp.ne.s32.totalorder %s119, %s135
      %p137 = scmp.eq.s32.totalorder %s17, 0
      %p138 = por %p136, %p137
      %p139 = scmp.le.s32.totalorder 1, %s11
      %p140 = scmp.lt.s32.totalorder %s11, 3
      %p141 = pnand %p139, %p140
      %p142 = pneg %p141
      // Predicated region
      $region9: #{gaussian_vae2d_forward.1} parent=5 // pred_check
        _
      $region10: #{gaussian_vae2d_forward.1} parent=5 // pred_check_branch
        %144 = sbr.rel (%p141) target = $region12
      $region11: #{gaussian_vae2d_forward.1} parent=5 // pred_region
        %s145 = ssub.s32 %s11, 1
        // Predicated region
        $region13: #{gaussian_vae2d_forward.1} parent=11 // pred_check
          %p146 = pneg %p58
        $region14: #{gaussian_vae2d_forward.1} parent=11 // pred_check_branch
          %148 = sbr.rel (%p146) target = $region16
        $region15: #{gaussian_vae2d_forward.1} parent=11 // pred_region
          _
        $region16: #{gaussian_vae2d_forward.1} parent=11 // pred_fallthru
          _
        // Predicated region
        $region17: #{gaussian_vae2d_forward.1} parent=11 // pred_check
          %p149 = pneg %p79
        $region18: #{gaussian_vae2d_forward.1} parent=11 // pred_check_branch
          %151 = sbr.rel (%p149) target = $region20
        $region19: #{gaussian_vae2d_forward.1} parent=11 // pred_region
          _
        $region20: #{gaussian_vae2d_forward.1} parent=11 // pred_fallthru
          _
      $region12: #{gaussian_vae2d_forward.1} parent=5 // pred_fallthru
        _
      %p152 = scmp.lt.s32.totalorder %s11, 2
      // Predicated region
      $region21: #{gaussian_vae2d_forward.1} parent=5 // pred_check
        %p153 = pneg %p152
      $region22: #{gaussian_vae2d_forward.1} parent=5 // pred_check_branch
        %155 = sbr.rel (%p153) target = $region24
      $region23: #{gaussian_vae2d_forward.1} parent=5 // pred_region
        // Predicated region
        $region25: #{gaussian_vae2d_forward.1} parent=23 // pred_check
          %p156 = pneg %p31
        $region26: #{gaussian_vae2d_forward.1} parent=23 // pred_check_branch
          %158 = sbr.rel (%p156) target = $region28
        $region27: #{gaussian_vae2d_forward.1} parent=23 // pred_region
          %s159 = sand.u32 %s21, 1
          %s160 = sand.u32 %s21, 1
          %s161 = smul.addr %s160, 80
          %s162 = scalar_lea.vmem [#allocation2], %s161
          %s163 = smul.u32 2, %s11
          %s164 = smul.addr %s163, 8
          %s165 = scalar_lea.vmem %s0, %s164
          // Predicated region
          $region29: #{gaussian_vae2d_forward.1} parent=27 // pred_check
            _
          $region30: #{gaussian_vae2d_forward.1} parent=27 // pred_check_branch
            %167 = sbr.rel (0) target = $region32
          $region31: #{gaussian_vae2d_forward.1} parent=27 // pred_region
            // Predicated region
            $region33: #{gaussian_vae2d_forward.1} parent=31 // pred_check
              _
            $region34: #{gaussian_vae2d_forward.1} parent=31 // pred_check_branch
              %169 = sbr.rel (0) target = $region36
            $region35: #{gaussian_vae2d_forward.1} parent=31 // pred_region
              loop: start=0, step=1, limit=1
              $region37: #{gaussian_vae2d_forward.1} parent=35 // loop_pre_header
                _
              $region38: #{gaussian_vae2d_forward.1} parent=35 // loop_header
                %s171 = sphi 0, %s175
                %p172 = scmp.ge.s32.totalorder %s171, 1
                %s176 = sphi %s165, %s165
                %s177 = sphi %s162, %s162
              $region39: #{gaussian_vae2d_forward.1} parent=35 // loop_header_branch
                %174 = sbr.rel (%p172) target = $region43
              $region40: #{gaussian_vae2d_forward.1} parent=35 // loop_body
                %v178 = vld [vmem:[%s176] sm:$0xff]
                %179 = vst [vmem:[%s177] sm:$0xff] %v178
                %v180 = vld [vmem:[%s176 + $0x8] sm:$0xff]
                %181 = vst [vmem:[%s177 + $0x8] sm:$0xff] %v180
                %v182 = vld [vmem:[%s176 + $0x20] sm:$0xff]
                %183 = vst [vmem:[%s177 + $0x10] sm:$0xff] %v182
                %v184 = vld [vmem:[%s176 + $0x28] sm:$0xff]
                %185 = vst [vmem:[%s177 + $0x18] sm:$0xff] %v184
                %v186 = vld [vmem:[%s176 + $0x40] sm:$0xff]
                %187 = vst [vmem:[%s177 + $0x20] sm:$0xff] %v186
                %v188 = vld [vmem:[%s176 + $0x48] sm:$0xff]
                %189 = vst [vmem:[%s177 + $0x28] sm:$0xff] %v188
                %v190 = vld [vmem:[%s176 + $0x60] sm:$0xff]
                %191 = vst [vmem:[%s177 + $0x30] sm:$0xff] %v190
                %v192 = vld [vmem:[%s176 + $0x68] sm:$0xff]
                %193 = vst [vmem:[%s177 + $0x38] sm:$0xff] %v192
                %v194 = vld [vmem:[%s176 + $0x80] sm:$0xff]
                %195 = vst [vmem:[%s177 + $0x40] sm:$0xff] %v194
                %v196 = vld [vmem:[%s176 + $0x88] sm:$0xff]
                %197 = vst [vmem:[%s177 + $0x48] sm:$0xff] %v196
              $region41: #{gaussian_vae2d_forward.1} parent=35 // loop_footer
                %s175 = sadd.s32 1, %s171
              $region42: #{gaussian_vae2d_forward.1} parent=35 // loop_footer_branch
                %170 = sbr.rel target = $region38
              $region43: #{gaussian_vae2d_forward.1} parent=35 // loop_exit
                _
            $region36: #{gaussian_vae2d_forward.1} parent=31 // pred_fallthru
              _
            // Predicated region
            $region44: #{gaussian_vae2d_forward.1} parent=31 // pred_check
              _
            $region45: #{gaussian_vae2d_forward.1} parent=31 // pred_check_branch
              %199 = sbr.rel target = $region47
            $region46: #{gaussian_vae2d_forward.1} parent=31 // pred_region
              _
            $region47: #{gaussian_vae2d_forward.1} parent=31 // pred_fallthru
              _
          $region32: #{gaussian_vae2d_forward.1} parent=27 // pred_fallthru
            _
          %200 = vnop
        $region28: #{gaussian_vae2d_forward.1} parent=23 // pred_fallthru
          _
      $region24: #{gaussian_vae2d_forward.1} parent=5 // pred_fallthru
        _
      %p201 = scmp.le.s32.totalorder 1, %s11
      %p202 = scmp.lt.s32.totalorder %s11, 3
      %p203 = pnand %p201, %p202
      %p204 = pneg %p203
      // Predicated region
      $region48: #{gaussian_vae2d_forward.1} parent=5 // pred_check
        _
      $region49: #{gaussian_vae2d_forward.1} parent=5 // pred_check_branch
        %206 = sbr.rel (%p203) target = $region51
      $region50: #{gaussian_vae2d_forward.1} parent=5 // pred_region
        %s207 = ssub.s32 %s11, 1
        %s208 = sand.u32 %s24, 1
        %s209 = sand.u32 %s24, 1
        %s210 = smul.addr %s209, 80
        %s211 = scalar_lea.vmem [#allocation2], %s210
        // Predicated region
        $region52: #{gaussian_vae2d_forward.1} parent=50 // pred_check
          %p212 = pneg %p37
        $region53: #{gaussian_vae2d_forward.1} parent=50 // pred_check_branch
          %214 = sbr.rel (%p212) target = $region55
        $region54: #{gaussian_vae2d_forward.1} parent=50 // pred_region
          _
        $region55: #{gaussian_vae2d_forward.1} parent=50 // pred_fallthru
          _
        %s215 = sand.u32 %s24, 1
        %s216 = sand.u32 %s24, 1
        %s217 = smul.addr %s216, 80
        %s218 = scalar_lea.vmem [#allocation2], %s217
        %p219 = pneg %p37
        %p220 = pneg %p34
        %p221 = pneg %p58
        %p222 = pneg %p55
        %p223 = pneg %p79
        %p224 = pneg %p76
        %p225 = pneg %p105
        %p226 = pneg %p102
        %s227 = smul.u32 2, %s16
        %p228 = scmp.lt.s32.totalorder %s227, 3
        %s229 = scalar_select %p228, %s227, 3
        %s230 = smul.addr %s229, 8
        %s231 = scalar_lea.vmem %s3, %s230
        %p232 = pneg %p131
        %p233 = pneg %p128
        %s234 = smul.u32 2, %s16
        %p235 = scmp.lt.s32.totalorder %s234, 3
        %s236 = scalar_select %p235, %s234, 3
        %s237 = smul.addr %s236, 8
        %s238 = scalar_lea.vmem %s4, %s237
        %s239 = smul.u32 2, %s16
        %s240 = smul.u32 2, %s16
        %p241 = scmp.lt.s32.totalorder %s240, 3
        %s242 = scalar_select %p241, %s240, 3
        %s243 = smul.addr %s242, 8
        %s244 = scalar_lea.vmem %s3, %s243
        %s245 = smul.u32 2, %s16
        %s246 = smul.u32 2, %s16
        %p247 = scmp.lt.s32.totalorder %s246, 3
        %s248 = scalar_select %p247, %s246, 3
        %s249 = smul.addr %s248, 8
        %s250 = scalar_lea.vmem %s4, %s249
        %s251 = smul.u32 2, %s16
        %v252 = vld [vmem:[%s1] sm:$0xff]
        %v253 = vld [vmem:[%s1 + $0x8] sm:$0xff]
        %v254 = vld [vmem:[%s211] sm:$0xff]
        %v255 = vld [vmem:[%s211 + $0x8] sm:$0xff]
        %v256 = vld [vmem:[%s211 + $0x10] sm:$0xff]
        %v257 = vld [vmem:[%s211 + $0x18] sm:$0xff]
        %v258 = vld [vmem:[%s211 + $0x20] sm:$0xff]
        %v259 = vld [vmem:[%s211 + $0x28] sm:$0xff]
        %v260 = vld [vmem:[%s211 + $0x30] sm:$0xff]
        %v261 = vld [vmem:[%s211 + $0x38] sm:$0xff]
        %v262 = vld [vmem:[%s211 + $0x40] sm:$0xf]
        %v263 = vld [vmem:[%s211 + $0x48] sm:$0xf]
        %v264 = vld [vmem:[%s2] sm:$0xff]
        %v265 = vld [vmem:[%s2 + $0x8] sm:$0xff]
        %267 = vset.pattern.permute.xlu0 0
        %268 = vperm.xlu0 %267, %v264
        %v269 = vpop.permute.xlu0 %268
        %272 = vset.pattern.permute.xlu0 0
        %273 = vperm.xlu0 %272, %v265
        %v274 = vpop.permute.xlu0 %273
        %vm276 = vcmask 293888
        %v278 = vsel %vm276, %v252, 0
        %v281 = vsel %vm276, %v253, 0
        %vm283 = vcmask 1043456
        %v285 = vsel %vm283, %v262, 0
        %v288 = vsel %vm283, %v263, 0
        %290 = vmatpush.msra.mxu0 0.0
        %291 = vmatpush.msra.mxu0 0.0
        %292 = vmatpush.msra.mxu0 0.0
        %293 = vmatpush.msra.mxu0 0.0
        %294 = vmatpush.msra.mxu0 0.0
        %295 = vmatpush.msra.mxu0 0.0
        %296 = vmatpush.msra.mxu0 0.0
        %297 = vmatpush.msra.mxu0 0.0
        %298 = vmatpush.msra.mxu0 0.0
        %299 = vmatpush.msra.mxu0 0.0
        %300 = vmatpush.msra.mxu0 0.0
        %301 = vmatpush.msra.mxu0 %v285
        %302 = vmatpush.msra.mxu0 %v260
        %303 = vmatpush.msra.mxu0 %v258
        %304 = vmatpush.msra.mxu0 %v256
        %305 = vmatpush.msra.mxu0 %v254
        %306 = vmatmul.f32.gmra.mxu0 %v278
        %v307 = vpop.f32.mrf.mxu0
        %v308 = vadd.f32 %v269, %v307
        %309 = vmatmul.f32.gmra.mxu0 %v281
        %v310 = vpop.f32.mrf.mxu0
        %v311 = vadd.f32 %v274, %v310
        %312 = vdwg.mxu0
        %313 = vmatpush.msra.mxu0 0.0
        %314 = vmatpush.msra.mxu0 0.0
        %315 = vmatpush.msra.mxu0 0.0
        %316 = vmatpush.msra.mxu0 0.0
        %317 = vmatpush.msra.mxu0 0.0
        %318 = vmatpush.msra.mxu0 0.0
        %319 = vmatpush.msra.mxu0 0.0
        %320 = vmatpush.msra.mxu0 0.0
        %321 = vmatpush.msra.mxu0 0.0
        %322 = vmatpush.msra.mxu0 0.0
        %323 = vmatpush.msra.mxu0 0.0
        %324 = vmatpush.msra.mxu0 %v288
        %325 = vmatpush.msra.mxu0 %v261
        %326 = vmatpush.msra.mxu0 %v259
        %327 = vmatpush.msra.mxu0 %v257
        %328 = vmatpush.msra.mxu0 %v255
        %329 = vmatmul.f32.gmra.mxu0 %v278
        %v330 = vpop.f32.mrf.mxu0
        %v331 = vadd.f32 %v269, %v330
        %332 = vmatmul.f32.gmra.mxu0 %v281
        %v333 = vpop.f32.mrf.mxu0
        %v334 = vadd.f32 %v274, %v333
        %335 = vdwg.mxu0
        %v336 = vmax.f32 %v311, 0.0
        %v337 = vmax.f32 %v334, 0.0
        %v338 = vand.u32 2147483647, %v311
        %v339 = vand.u32 2147483647, %v334
        %v340 = vsub.f32 0.0, %v338
        %v341 = vsub.f32 0.0, %v339
        %v342 = vmul.f32 %v340, 1.442695
        %v343 = vpow.pop %v342
        %v344 = vmul.f32 %v341, 1.442695
        %v345 = vpow.pop %v344
        %v346 = vadd.f32 %v343, 1.0
        %v347 = vlog2.pop %v346
        %v348 = vmul.f32 %v347, 0.6931472
        %v349 = vmul.f32 -0.5, %v343
        %v350 = vadd.f32 %v349, 1.0
        %v351 = vmul.f32 %v350, %v343
        %v352 = vand.u32 2147483647, %v343
        %vm353 = vcmp.lt.f32.partialorder %v352, 0.0004427343
        %v354 = vsel %vm353, %v351, %v348
        %v355 = vadd.f32 %v345, 1.0
        %v356 = vlog2.pop %v355
        %v357 = vmul.f32 %v356, 0.6931472
        %v358 = vmul.f32 -0.5, %v345
        %v359 = vadd.f32 %v358, 1.0
        %v360 = vmul.f32 %v359, %v345
        %v361 = vand.u32 2147483647, %v345
        %vm362 = vcmp.lt.f32.partialorder %v361, 0.0004427343
        %v363 = vsel %vm362, %v360, %v357
        %v364 = vadd.f32 %v336, %v354
        %v365 = vadd.f32 %v337, %v363
        %366 = vst [vmem:[%s244] sm:$0xff] %v308
        %367 = vst [vmem:[%s244 + $0x8] sm:$0xff] %v331
        %368 = vst [vmem:[%s250] sm:$0xff] %v364
        %369 = vst [vmem:[%s250 + $0x8] sm:$0xff] %v365
        %s370 = smul.u32 2, %s16
        %p371 = scmp.lt.s32.totalorder %s370, 3
        %s372 = scalar_select %p371, %s370, 3
        %s373 = smul.addr %s372, 8
        %s374 = scalar_lea.vmem %s3, %s373
        %s375 = smul.u32 2, %s16
        %p376 = scmp.lt.s32.totalorder %s375, 3
        %s377 = scalar_select %p376, %s375, 3
        %s378 = smul.addr %s377, 8
        %s379 = scalar_lea.vmem %s4, %s378
        // Predicated region
        $region56: #{gaussian_vae2d_forward.1} parent=50 // pred_check
          %p380 = pneg %p102
        $region57: #{gaussian_vae2d_forward.1} parent=50 // pred_check_branch
          %382 = sbr.rel (%p380) target = $region59
        $region58: #{gaussian_vae2d_forward.1} parent=50 // pred_region
          %s383 = smul.u32 2, %s16
        $region59: #{gaussian_vae2d_forward.1} parent=50 // pred_fallthru
          _
        // Predicated region
        $region60: #{gaussian_vae2d_forward.1} parent=50 // pred_check
          %p384 = pneg %p128
        $region61: #{gaussian_vae2d_forward.1} parent=50 // pred_check_branch
          %386 = sbr.rel (%p384) target = $region63
        $region62: #{gaussian_vae2d_forward.1} parent=50 // pred_region
          %s387 = smul.u32 2, %s16
        $region63: #{gaussian_vae2d_forward.1} parent=50 // pred_fallthru
          _
      $region51: #{gaussian_vae2d_forward.1} parent=5 // pred_fallthru
        _
      %p388 = scmp.le.s32.totalorder 2, %s11
      // Predicated region
      $region64: #{gaussian_vae2d_forward.1} parent=5 // pred_check
        %p389 = pneg %p388
      $region65: #{gaussian_vae2d_forward.1} parent=5 // pred_check_branch
        %391 = sbr.rel (%p389) target = $region67
      $region66: #{gaussian_vae2d_forward.1} parent=5 // pred_region
        %s392 = ssub.s32 %s11, 2
        // Predicated region
        $region68: #{gaussian_vae2d_forward.1} parent=66 // pred_check
          %p393 = pneg %p108
        $region69: #{gaussian_vae2d_forward.1} parent=66 // pred_check_branch
          %395 = sbr.rel (%p393) target = $region71
        $region70: #{gaussian_vae2d_forward.1} parent=66 // pred_region
          %s396 = smul.u32 2, %s17
          %p397 = scmp.lt.s32.totalorder %s396, 3
          %s398 = scalar_select %p397, %s396, 3
          %s399 = smul.addr %s398, 8
          %s400 = scalar_lea.vmem %s3, %s399
        $region71: #{gaussian_vae2d_forward.1} parent=66 // pred_fallthru
          _
        // Predicated region
        $region72: #{gaussian_vae2d_forward.1} parent=66 // pred_check
          %p401 = pneg %p134
        $region73: #{gaussian_vae2d_forward.1} parent=66 // pred_check_branch
          %403 = sbr.rel (%p401) target = $region75
        $region74: #{gaussian_vae2d_forward.1} parent=66 // pred_region
          %s404 = smul.u32 2, %s17
          %p405 = scmp.lt.s32.totalorder %s404, 3
          %s406 = scalar_select %p405, %s404, 3
          %s407 = smul.addr %s406, 8
          %s408 = scalar_lea.vmem %s4, %s407
        $region75: #{gaussian_vae2d_forward.1} parent=66 // pred_fallthru
          _
      $region67: #{gaussian_vae2d_forward.1} parent=5 // pred_fallthru
        _
    $region6: #{gaussian_vae2d_forward.1} parent=1 // loop_footer
      %s15 = sadd.s32 1, %s11
    $region7: #{gaussian_vae2d_forward.1} parent=1 // loop_footer_branch
      %10 = sbr.rel target = $region3
    $region8: #{gaussian_vae2d_forward.1} parent=1 // loop_exit
      _

</llo_original>
